<compile_context>
chip_gen: v6e
topology: v6e:2x2x1
jax: 0.10.0
libtpu: 0.0.40
codegen_flags: <defaults>
</compile_context>

<pallas_src>
import functools

import jax
import jax.numpy as jnp
from jax.experimental import pallas as pl
from jax.experimental.pallas import tpu as pltpu

_LANES = 128
_MAX_THW = 128 * 1024          # lane cap on a single spatial tile
_N_F32_TMP = 6                 # logits, e, prob, onehot, products, pred_pow


def _dice_kernel(pred_ref, tgt_ref, out_ref, num_acc, den_acc, *,
                 smooth, exponent, ignore_index, num_classes,
                 hw_actual, thw, needs_lane_mask):
    h = pl.program_id(1)

    @pl.when(h == 0)
    def _():
        num_acc[...] = jnp.zeros_like(num_acc)
        den_acc[...] = jnp.zeros_like(den_acc)

    C = num_classes
    logits = pred_ref[0].astype(jnp.float32)                 # (C, THW)
    tgt = tgt_ref[0].astype(jnp.int32)                       # (1, THW)

    # Softmax over the class (sublane) axis: one reciprocal of the row-sum and
    # a multiply instead of a full (C, THW) divide.
    m = jnp.max(logits, axis=0, keepdims=True)               # (1, THW)
    e = jnp.exp(logits - m)                                   # (C, THW)
    inv = 1.0 / jnp.sum(e, axis=0, keepdims=True)             # (1, THW)
    prob = e * inv                                            # (C, THW)

    # Valid mask for ignored pixels and one-hot of the clipped target, built
    # from a (C, 1) class iota (no (C, THW) int32 iota temp).
    valid = (tgt != ignore_index).astype(jnp.float32)         # (1, THW)
    tgt_c = jnp.clip(tgt, 0, C - 1)                           # (1, THW)
    class_ids = jax.lax.broadcasted_iota(jnp.int32, (C, 1), 0)
    onehot = (class_ids == tgt_c).astype(jnp.float32)         # (C, THW)

    # Mask lanes past the real HW extent (partial last block, no wrapper pad).
    # jnp.where (not multiply) so undefined out-of-bounds data -> exact 0.
    if needs_lane_mask:
        lane = jax.lax.broadcasted_iota(jnp.int32, (1, thw), 1) + h * thw
        in_range = lane < hw_actual                            # (1, THW)
        prob = jnp.where(in_range, prob, 0.0)
        onehot = jnp.where(in_range, onehot, 0.0)

    num_acc[...] += jnp.sum(prob * onehot * valid, axis=1, keepdims=True)

    # pred ** exponent: repeated multiplies for small integer exponents (keeps
    # the single EUP slot free); one-hot**exponent == one-hot for exponent > 0.
    exp_is_int = float(exponent) == int(exponent)
    if exp_is_int and 1 <= int(exponent) <= 4:
        pred_pow = prob
        for _ in range(int(exponent) - 1):
            pred_pow = pred_pow * prob
    else:
        pred_pow = prob ** exponent
    den_acc[...] += jnp.sum(pred_pow + onehot, axis=1, keepdims=True)

    @pl.when(h == pl.num_programs(1) - 1)
    def _():
        num = 2.0 * num_acc[...] + smooth                      # (C, 1)
        den = den_acc[...] + smooth                            # (C, 1)
        per_class = 1.0 - num / den
        if 0 <= ignore_index < num_classes:
            include = (jax.lax.broadcasted_iota(jnp.int32, (C, 1), 0)
                       != ignore_index)
            per_class = jnp.where(include, per_class, 0.0)
        loss = jnp.sum(per_class, axis=0, keepdims=True) * (1.0 / num_classes)
        out_ref[...] = jnp.broadcast_to(loss.reshape(1, 1, 1), (1, 1, _LANES))


def _vmem_budget():
    """(vmem_limit_bytes, working-set budget) derived from the local chip."""
    phys = None
    try:
        phys = int(pltpu.get_tpu_info().vmem_capacity_bytes)
    except Exception:
        phys = None
    if not phys or phys <= 0:
        phys = 64 * 1024 * 1024                    # v7x per-core: safe floor
    limit = min(64 * 1024 * 1024, max(32 * 1024 * 1024, phys // 2))
    limit = min(limit, phys)
    return limit, limit // 2                       # 2x headroom for compiler


def _pick_thw(C, HW, pred_itemsize, tgt_itemsize, budget_bytes):
    """Spatial tile: largest multiple of 128 whose full working set (2x
    double-buffered pred+target tiles + f32 in-kernel temporaries) fits the
    VMEM budget.  No artificial small cap (perf review)."""
    if HW <= _LANES:
        return int(HW)                             # single full-dim tile
    per_lane = (2 * C * pred_itemsize              # double-buffered pred tile
                + 2 * tgt_itemsize                 # double-buffered tgt tile
                + _N_F32_TMP * C * 4               # f32 temporaries
                + 16)                              # (1, THW) row temps
    max_thw = max(_LANES, (budget_bytes // per_lane) // _LANES * _LANES)
    hw_full_lanes = (HW // _LANES) * _LANES        # >= 128 here
    return int(min(max_thw, hw_full_lanes, _MAX_THW))


def dice_loss_tpu(pred_nchw, target_nhw, *, smooth=1.0, exponent=2,
                  loss_weight=1.0, ignore_index=255, reduction='mean'):
    N, C, H, W = pred_nchw.shape
    HW = H * W
    pred = pred_nchw.reshape(N, C, HW)             # keep HBM dtype; cast in-kernel
    tgt = target_nhw.reshape(N, 1, HW)
    # Keep uint8 labels narrow in HBM (widened in-kernel); anything else int32.
    if tgt.dtype != jnp.uint8:
        tgt = tgt.astype(jnp.int32)

    vmem_limit, budget = _vmem_budget()
    thw = _pick_thw(C, HW, jnp.dtype(pred.dtype).itemsize,
                    jnp.dtype(tgt.dtype).itemsize, budget)
    hw_tiles = pl.cdiv(HW, thw)

    kernel = functools.partial(
        _dice_kernel,
        smooth=float(smooth),
        exponent=exponent,
        ignore_index=int(ignore_index),
        num_classes=C,
        hw_actual=HW,
        thw=thw,
        needs_lane_mask=(HW % thw != 0),
    )

    out = pl.pallas_call(
        kernel,
        out_shape=jax.ShapeDtypeStruct((N, 1, _LANES), jnp.float32),
        grid_spec=pltpu.PrefetchScalarGridSpec(
            num_scalar_prefetch=0,
            grid=(N, hw_tiles),
            in_specs=[
                pl.BlockSpec((1, C, thw), lambda n, h: (n, 0, h)),
                pl.BlockSpec((1, 1, thw), lambda n, h: (n, 0, h)),
            ],
            out_specs=pl.BlockSpec((1, 1, _LANES), lambda n, h: (n, 0, 0)),
            scratch_shapes=[
                pltpu.VMEM((C, 1), jnp.float32),   # per-class num accumulator
                pltpu.VMEM((C, 1), jnp.float32),   # per-class den accumulator
            ],
        ),
        compiler_params=pltpu.CompilerParams(
            dimension_semantics=("parallel", "arbitrary"),
            vmem_limit_bytes=int(vmem_limit)),
    )(pred, tgt)

    per_sample = out[:, 0, 0]                      # (N,)
    if reduction == 'mean':
        return loss_weight * jnp.mean(per_sample)
    elif reduction == 'sum':
        return loss_weight * jnp.sum(per_sample)
    return loss_weight * per_sample


def dice_loss_ref(pred, target, *, smooth=1.0, exponent=2, loss_weight=1.0,
                  ignore_index=255):
    """Pure-JAX reference mirroring the PyTorch forward."""
    N, C, H, W = pred.shape
    prob = jax.nn.softmax(pred.astype(jnp.float32), axis=1)
    onehot = jax.nn.one_hot(jnp.clip(target, 0, C - 1), C, dtype=jnp.float32)
    valid = (target != ignore_index).astype(jnp.float32).reshape(N, -1)
    total = jnp.zeros((N,), jnp.float32)
    for i in range(C):
        if i == ignore_index:
            continue
        p = prob[:, i].reshape(N, -1)
        t = onehot[..., i].reshape(N, -1)
        num = jnp.sum(p * t * valid, axis=1) * 2 + smooth
        den = jnp.sum(p ** exponent + t ** exponent, axis=1) + smooth
        total = total + (1.0 - num / den)
    return loss_weight * jnp.mean(total / C)


if __name__ == "__main__":
    key = jax.random.PRNGKey(0)
    k1, k2, k3 = jax.random.split(key, 3)

    N, C, H, W = 2, 4, 16, 16
    pred = jax.random.normal(k1, (N, C, H, W), dtype=jnp.float32)
    # uint8 labels (exercises the narrow-target HBM path)
    target = jax.random.randint(k2, (N, H, W), 0, C, dtype=jnp.int32).astype(jnp.uint8)
    ignore_mask = jax.random.bernoulli(k3, 0.1, (N, H, W))
    target = jnp.where(ignore_mask, jnp.uint8(255), target)

    loss = dice_loss_tpu(pred, target)
    loss = jax.block_until_ready(loss)

    ref = dice_loss_ref(pred, target)
    assert jnp.allclose(loss, ref, rtol=1e-4, atol=1e-5), (loss, ref)

    print("KERNEL_OK")
</pallas_src>

<mosaic_0001>
module attributes {stable_mosaic.version = 11 : i64} {
  func.func @_dice_kernel(%arg0: i32, %arg1: i32, %arg2: memref<1x4x256xf32, #tpu.memory_space<vmem>>, %arg3: memref<1x1x256xi8, #tpu.memory_space<vmem>>, %arg4: memref<1x1x128xf32, #tpu.memory_space<vmem>>, %arg5: memref<4x1xf32, #tpu.memory_space<vmem>>, %arg6: memref<4x1xf32, #tpu.memory_space<vmem>>) attributes {dimension_semantics = [#tpu.dimension_semantics<parallel>, #tpu.dimension_semantics<arbitrary>], iteration_bounds = array<i64: 2, 1>, scalar_prefetch = 0 : i64, scratch_operands = 2 : i64, tpu.core_type = #tpu.core_type<tc>, window_params = [{transform_indices = @transform_0, window_bounds = array<i64: 1, 4, 256>}, {transform_indices = @transform_1, window_bounds = array<i64: 1, 1, 256>}, {transform_indices = @transform_2, window_bounds = array<i64: 1, 1, 128>}]} {
    %c0_i32 = arith.constant 0 : i32
    %0 = arith.cmpi eq, %arg1, %c0_i32 : i32
    %1 = arith.extui %0 : i1 to i32
    %c0_i32_0 = arith.constant 0 : i32
    %2 = arith.cmpi ne, %1, %c0_i32_0 : i32
    scf.if %2 {
      %cst_21 = arith.constant 0.000000e+00 : f32
      %51 = vector.broadcast %cst_21 : f32 to vector<4x1xf32>
      %c0_22 = arith.constant 0 : index
      %c0_23 = arith.constant 0 : index
      %52 = vector.load %arg5[%c0_22, %c0_23] : memref<4x1xf32, #tpu.memory_space<vmem>>, vector<4x1xf32>
      tpu.vector_store %arg5[%c0_22, %c0_23], %51 {strides = array<i32>} : memref<4x1xf32, #tpu.memory_space<vmem>>, vector<4x1xf32>,
      %cst_24 = arith.constant 0.000000e+00 : f32
      %53 = vector.broadcast %cst_24 : f32 to vector<4x1xf32>
      %c0_25 = arith.constant 0 : index
      %c0_26 = arith.constant 0 : index
      %54 = vector.load %arg6[%c0_25, %c0_26] : memref<4x1xf32, #tpu.memory_space<vmem>>, vector<4x1xf32>
      tpu.vector_store %arg6[%c0_25, %c0_26], %53 {strides = array<i32>} : memref<4x1xf32, #tpu.memory_space<vmem>>, vector<4x1xf32>,
    } else {
    }
    %c0 = arith.constant 0 : index
    %c0_1 = arith.constant 0 : index
    %c0_2 = arith.constant 0 : index
    %3 = vector.load %arg2[%c0, %c0_1, %c0_2] : memref<1x4x256xf32, #tpu.memory_space<vmem>>, vector<1x4x256xf32>
    %4 = vector.shape_cast %3 : vector<1x4x256xf32> to vector<4x256xf32>
    %c0_3 = arith.constant 0 : index
    %c0_4 = arith.constant 0 : index
    %c0_5 = arith.constant 0 : index
    %5 = vector.load %arg3[%c0_3, %c0_4, %c0_5] : memref<1x1x256xi8, #tpu.memory_space<vmem>>, vector<1x1x256xi8>
    %6 = vector.shape_cast %5 : vector<1x1x256xi8> to vector<1x256xi8>
    %7 = arith.extui %6 : vector<1x256xi8> to vector<1x256xi32>
    %cst = arith.constant dense<0xFF800000> : vector<256xf32>
    %8 = vector.multi_reduction <maximumf>, %4, %cst [0] : vector<4x256xf32> to vector<256xf32>
    %9 = vector.shape_cast %8 : vector<256xf32> to vector<1x256xf32>
    %10 = vector.broadcast %9 : vector<1x256xf32> to vector<4x256xf32>
    %11 = arith.subf %4, %10 : vector<4x256xf32>
    %12 = math.exp %11 : vector<4x256xf32>
    %cst_6 = arith.constant dense<0.000000e+00> : vector<256xf32>
    %13 = vector.multi_reduction <add>, %12, %cst_6 [0] : vector<4x256xf32> to vector<256xf32>
    %14 = vector.shape_cast %13 : vector<256xf32> to vector<1x256xf32>
    %cst_7 = arith.constant 1.000000e+00 : f32
    %15 = vector.broadcast %cst_7 : f32 to vector<1x256xf32>
    %16 = arith.divf %15, %14 : vector<1x256xf32>
    %17 = vector.broadcast %16 : vector<1x256xf32> to vector<4x256xf32>
    %18 = arith.mulf %12, %17 : vector<4x256xf32>
    %c255_i32 = arith.constant 255 : i32
    %19 = vector.broadcast %c255_i32 : i32 to vector<1x256xi32>
    %20 = arith.cmpi ne, %7, %19 : vector<1x256xi32>
    %21 = arith.extui %20 : vector<1x256xi1> to vector<1x256xi32>
    %22 = arith.sitofp %21 : vector<1x256xi32> to vector<1x256xf32>
    %c0_i32_8 = arith.constant 0 : i32
    %c3_i32 = arith.constant 3 : i32
    %23 = vector.broadcast %c0_i32_8 : i32 to vector<1x256xi32>
    %24 = arith.maxsi %23, %7 : vector<1x256xi32>
    %25 = vector.broadcast %c3_i32 : i32 to vector<1x256xi32>
    %26 = arith.minsi %25, %24 : vector<1x256xi32>
    %27 = tpu.iota {dimensions = array<i32: 0>} : vector<4x1xi32>
    %28 = vector.broadcast %27 : vector<4x1xi32> to vector<4x256xi32>
    %29 = vector.broadcast %26 : vector<1x256xi32> to vector<4x256xi32>
    %30 = arith.cmpi eq, %28, %29 : vector<4x256xi32>
    %31 = arith.extui %30 : vector<4x256xi1> to vector<4x256xi32>
    %32 = arith.sitofp %31 : vector<4x256xi32> to vector<4x256xf32>
    %c0_9 = arith.constant 0 : index
    %c0_10 = arith.constant 0 : index
    %33 = vector.load %arg5[%c0_9, %c0_10] : memref<4x1xf32, #tpu.memory_space<vmem>>, vector<4x1xf32>
    %34 = arith.mulf %18, %32 : vector<4x256xf32>
    %35 = vector.broadcast %22 : vector<1x256xf32> to vector<4x256xf32>
    %36 = arith.mulf %34, %35 : vector<4x256xf32>
    %cst_11 = arith.constant dense<0.000000e+00> : vector<4xf32>
    %37 = vector.multi_reduction <add>, %36, %cst_11 [1] : vector<4x256xf32> to vector<4xf32>
    %38 = vector.shape_cast %37 : vector<4xf32> to vector<4x1xf32>
    %39 = arith.addf %33, %38 : vector<4x1xf32>
    %c0_12 = arith.constant 0 : index
    %c0_13 = arith.constant 0 : index
    %40 = vector.load %arg5[%c0_12, %c0_13] : memref<4x1xf32, #tpu.memory_space<vmem>>, vector<4x1xf32>
    tpu.vector_store %arg5[%c0_12, %c0_13], %39 {strides = array<i32>} : memref<4x1xf32, #tpu.memory_space<vmem>>, vector<4x1xf32>,
    %41 = arith.mulf %18, %18 : vector<4x256xf32>
    %c0_14 = arith.constant 0 : index
    %c0_15 = arith.constant 0 : index
    %42 = vector.load %arg6[%c0_14, %c0_15] : memref<4x1xf32, #tpu.memory_space<vmem>>, vector<4x1xf32>
    %43 = arith.addf %41, %32 : vector<4x256xf32>
    %cst_16 = arith.constant dense<0.000000e+00> : vector<4xf32>
    %44 = vector.multi_reduction <add>, %43, %cst_16 [1] : vector<4x256xf32> to vector<4xf32>
    %45 = vector.shape_cast %44 : vector<4xf32> to vector<4x1xf32>
    %46 = arith.addf %42, %45 : vector<4x1xf32>
    %c0_17 = arith.constant 0 : index
    %c0_18 = arith.constant 0 : index
    %47 = vector.load %arg6[%c0_17, %c0_18] : memref<4x1xf32, #tpu.memory_space<vmem>>, vector<4x1xf32>
    tpu.vector_store %arg6[%c0_17, %c0_18], %46 {strides = array<i32>} : memref<4x1xf32, #tpu.memory_space<vmem>>, vector<4x1xf32>,
    %c0_i32_19 = arith.constant 0 : i32
    %48 = arith.cmpi eq, %arg1, %c0_i32_19 : i32
    %49 = arith.extui %48 : i1 to i32
    %c0_i32_20 = arith.constant 0 : i32
    %50 = arith.cmpi ne, %49, %c0_i32_20 : i32
    scf.if %50 {
      %c0_21 = arith.constant 0 : index
      %c0_22 = arith.constant 0 : index
      %51 = vector.load %arg5[%c0_21, %c0_22] : memref<4x1xf32, #tpu.memory_space<vmem>>, vector<4x1xf32>
      %cst_23 = arith.constant 2.000000e+00 : f32
      %52 = vector.broadcast %cst_23 : f32 to vector<4x1xf32>
      %53 = arith.mulf %52, %51 : vector<4x1xf32>
      %cst_24 = arith.constant 1.000000e+00 : f32
      %54 = vector.broadcast %cst_24 : f32 to vector<4x1xf32>
      %55 = arith.addf %53, %54 : vector<4x1xf32>
      %c0_25 = arith.constant 0 : index
      %c0_26 = arith.constant 0 : index
      %56 = vector.load %arg6[%c0_25, %c0_26] : memref<4x1xf32, #tpu.memory_space<vmem>>, vector<4x1xf32>
      %cst_27 = arith.constant 1.000000e+00 : f32
      %57 = vector.broadcast %cst_27 : f32 to vector<4x1xf32>
      %58 = arith.addf %56, %57 : vector<4x1xf32>
      %59 = arith.divf %55, %58 : vector<4x1xf32>
      %cst_28 = arith.constant 1.000000e+00 : f32
      %60 = vector.broadcast %cst_28 : f32 to vector<4x1xf32>
      %61 = arith.subf %60, %59 : vector<4x1xf32>
      %cst_29 = arith.constant dense<0.000000e+00> : vector<1xf32>
      %62 = vector.multi_reduction <add>, %61, %cst_29 [0] : vector<4x1xf32> to vector<1xf32>
      %63 = vector.shape_cast %62 : vector<1xf32> to vector<1x1xf32>
      %cst_30 = arith.constant 2.500000e-01 : f32
      %64 = vector.broadcast %cst_30 : f32 to vector<1x1xf32>
      %65 = arith.mulf %63, %64 : vector<1x1xf32>
      %66 = vector.shape_cast %65 : vector<1x1xf32> to vector<1x1x1xf32>
      %67 = vector.shape_cast %66 : vector<1x1x1xf32> to vector<1x1x1xf32>
      %68 = vector.broadcast %67 : vector<1x1x1xf32> to vector<1x1x128xf32>
      %c0_31 = arith.constant 0 : index
      %c0_32 = arith.constant 0 : index
      %c0_33 = arith.constant 0 : index
      %69 = vector.load %arg4[%c0_31, %c0_32, %c0_33] : memref<1x1x128xf32, #tpu.memory_space<vmem>>, vector<1x1x128xf32>
      tpu.vector_store %arg4[%c0_31, %c0_32, %c0_33], %68 {strides = array<i32>} : memref<1x1x128xf32, #tpu.memory_space<vmem>>, vector<1x1x128xf32>,
    } else {
    }
    return
  }
  func.func @transform_0(%arg0: i32, %arg1: i32) -> (i32, i32, i32) {
    %c0_i32 = arith.constant 0 : i32
    %c0_i32_0 = arith.constant 0 : i32
    return %arg0, %c0_i32, %arg1 : i32, i32, i32
  }
  func.func @transform_1(%arg0: i32, %arg1: i32) -> (i32, i32, i32) {
    %c0_i32 = arith.constant 0 : i32
    %c0_i32_0 = arith.constant 0 : i32
    return %arg0, %c0_i32, %arg1 : i32, i32, i32
  }
  func.func @transform_2(%arg0: i32, %arg1: i32) -> (i32, i32, i32) {
    %c0_i32 = arith.constant 0 : i32
    %c0_i32_0 = arith.constant 0 : i32
    %c0_i32_1 = arith.constant 0 : i32
    return %arg0, %c0_i32, %c0_i32_0 : i32, i32, i32
  }
}

</mosaic_0001>

<llo_original>
// kernel: tpu_custom_call.1
$region0: #{tpu_custom_call.1}
  #allocation0 [shape = 'u32[]', space=smem, size = 0x4, offset = 0x4, fixed_abs, tag = 'smem constant byte address 0x4 - core index']
  #allocation1 [shape = 'u32[144,128]{1,0:T(1,128)}', space=vmem, size = 0x12000, scoped, tag = 'internal scratch']
  #allocation2 [shape = 'f32[4,1]{1,0:T(4,128)}', space=vmem, size = 0x800, scoped, tag = 'scratch operand']
  #allocation3 [shape = 'f32[4,1]{1,0:T(4,128)}', space=vmem, size = 0x800, scoped, tag = 'scratch operand']
  %s0 = inlined_call_operand.hbm [shape: f32[2,4,256], index: 0, kind: input, shape index: {}]
  %s1 = inlined_call_operand.vmem [shape: u8[2,1,256], index: 1, kind: input, shape index: {}]
  %s2 = inlined_call_operand.hbm [shape: f32[2,1,128], index: 2, kind: output, shape index: {}]
  %s3 = sld [smem:[#allocation0]]
  $region53: #{tpu_custom_call.1} parent=0
    _
  %s5 = ssub.s32 1, %s3
  %s6 = scalar_select 0, %s5, %s3
  $region1: #{tpu_custom_call.1} parent=0
    #allocation4 [shape = 'u8[8192]{0}', space=vmem, size = 0x2000, scoped, tag = 'input window, operand 0']
    #allocation5 [shape = 's32[2]{0}', space=sflag, size = 0x8, scoped, tag = 'scoped memory for tpu_custom_call.1']
    #allocation6 [shape = 's32[2]{0}', space=sflag, size = 0x8, scoped, tag = 'scoped memory for tpu_custom_call.1']
    #allocation7 [shape = 'u8[1024]{0}', space=vmem, size = 0x400, scoped, tag = 'output window, operand 0']
    %7 = vsyncpa [#allocation5], 0
    %s8 = scalar_lea.sflag [#allocation5], 1
    %9 = vsyncpa %s8, 0
    %10 = vsyncpa [#allocation6], 0
    %s11 = scalar_lea.sflag [#allocation6], 1
    %12 = vsyncpa %s11, 0
    loop: start=0, step=1, limit=4
    $region2: #{tpu_custom_call.1} parent=1 // loop_pre_header
      _
    $region3: #{tpu_custom_call.1} parent=1 // loop_header
      %s14 = sphi 0, %s18
      %p15 = scmp.ge.s32.totalorder %s14, 4
      %s21 = sphi 0, %s33
      %s22 = sphi 0, %s29
      %s23 = sphi 0, %s21
      %s24 = sphi 0, %s22
      %s25 = sphi 0, %s23
      %s26 = sphi 0, %s24
      %s38 = sphi 0, %s40
      %s41 = sphi 0, %s38
      %s42 = sphi 0, %s41
      %s58 = sphi 0, %s42
      %s66 = sphi 0, %s68
      %s69 = sphi 0, %s66
      %s70 = sphi 0, %s69
      %s86 = sphi 0, %s70
      %s92 = sphi 0, %s94
      %s95 = sphi 0, %s92
      %s96 = sphi 0, %s95
      %s112 = sphi 0, %s96
    $region4: #{tpu_custom_call.1} parent=1 // loop_header_branch
      %17 = sbr.rel (%p15) target = $region8
    $region5: #{tpu_custom_call.1} parent=1 // loop_body
      %s19 = ssub.s32 %s14, 1
      %s20 = ssub.s32 %s14, 2
      %s27 = sadd.s32 1, %s22
      %p28 = scmp.ge.s32.totalorder %s27, 1
      %s29 = scalar_select %p28, 0, %s27
      %s30 = sadd.s32 1, %s21
      %s31 = scalar_select %p28, %s30, %s21
      %p32 = scmp.ge.s32.totalorder %s31, 2
      %s33 = scalar_select %p32, 0, %s31
      %s34 = ssub.s32 %s21, %s33
      %s35 = ssub.s32 %s22, %s29
      %s36 = sor.u32 %s34, %s35
      %p37 = scmp.eq.s32.totalorder %s36, 0
      %s39 = sadd.s32 %s38, 1
      %s40 = scalar_select %p37, %s38, %s39
      %p43 = pneg %p37
      %p44 = scmp.eq.s32.totalorder %s14, 1
      %p45 = por %p43, %p44
      %p46 = scmp.ne.s32.totalorder %s38, %s41
      %p47 = scmp.eq.s32.totalorder %s14, 0
      %p48 = por %p46, %p47
      %p49 = scmp.ne.s32.totalorder %s38, %s41
      %p50 = scmp.eq.s32.totalorder %s19, 1
      %p51 = por %p49, %p50
      %p52 = scmp.ne.s32.totalorder %s41, %s42
      %p53 = scmp.eq.s32.totalorder %s19, 0
      %p54 = por %p52, %p53
      %p55 = scmp.ne.s32.totalorder %s41, %s42
      %p56 = scmp.eq.s32.totalorder %s20, 1
      %p57 = por %p55, %p56
      %p59 = scmp.ne.s32.totalorder %s42, %s58
      %p60 = scmp.eq.s32.totalorder %s20, 0
      %p61 = por %p59, %p60
      %s62 = ssub.s32 %s21, %s33
      %s63 = ssub.s32 %s22, %s29
      %s64 = sor.u32 %s62, %s63
      %p65 = scmp.eq.s32.totalorder %s64, 0
      %s67 = sadd.s32 %s66, 1
      %s68 = scalar_select %p65, %s66, %s67
      %p71 = pneg %p65
      %p72 = scmp.eq.s32.totalorder %s14, 1
      %p73 = por %p71, %p72
      %p74 = scmp.ne.s32.totalorder %s66, %s69
      %p75 = scmp.eq.s32.totalorder %s14, 0
      %p76 = por %p74, %p75
      %p77 = scmp.ne.s32.totalorder %s66, %s69
      %p78 = scmp.eq.s32.totalorder %s19, 1
      %p79 = por %p77, %p78
      %p80 = scmp.ne.s32.totalorder %s69, %s70
      %p81 = scmp.eq.s32.totalorder %s19, 0
      %p82 = por %p80, %p81
      %p83 = scmp.ne.s32.totalorder %s69, %s70
      %p84 = scmp.eq.s32.totalorder %s20, 1
      %p85 = por %p83, %p84
      %p87 = scmp.ne.s32.totalorder %s70, %s86
      %p88 = scmp.eq.s32.totalorder %s20, 0
      %p89 = por %p87, %p88
      %s90 = ssub.s32 %s21, %s33
      %p91 = scmp.eq.s32.totalorder %s90, 0
      %s93 = sadd.s32 %s92, 1
      %s94 = scalar_select %p91, %s92, %s93
      %p97 = pneg %p91
      %p98 = scmp.eq.s32.totalorder %s14, 1
      %p99 = por %p97, %p98
      %p100 = scmp.ne.s32.totalorder %s92, %s95
      %p101 = scmp.eq.s32.totalorder %s14, 0
      %p102 = por %p100, %p101
      %p103 = scmp.ne.s32.totalorder %s92, %s95
      %p104 = scmp.eq.s32.totalorder %s19, 1
      %p105 = por %p103, %p104
      %p106 = scmp.ne.s32.totalorder %s95, %s96
      %p107 = scmp.eq.s32.totalorder %s19, 0
      %p108 = por %p106, %p107
      %p109 = scmp.ne.s32.totalorder %s95, %s96
      %p110 = scmp.eq.s32.totalorder %s20, 1
      %p111 = por %p109, %p110
      %p113 = scmp.ne.s32.totalorder %s96, %s112
      %p114 = scmp.eq.s32.totalorder %s20, 0
      %p115 = por %p113, %p114
      %p116 = scmp.le.s32.totalorder 1, %s14
      %p117 = scmp.lt.s32.totalorder %s14, 3
      %p118 = pnand %p116, %p117
      %p119 = pneg %p118
      // Predicated region
      $region9: #{tpu_custom_call.1} parent=5 // pred_check
        _
      $region10: #{tpu_custom_call.1} parent=5 // pred_check_branch
        %121 = sbr.rel (%p118) target = $region12
      $region11: #{tpu_custom_call.1} parent=5 // pred_region
        %s122 = ssub.s32 %s14, 1
      $region12: #{tpu_custom_call.1} parent=5 // pred_fallthru
        _
      %p123 = scmp.lt.s32.totalorder %s14, 2
      // Predicated region
      $region13: #{tpu_custom_call.1} parent=5 // pred_check
        %p124 = pneg %p123
      $region14: #{tpu_custom_call.1} parent=5 // pred_check_branch
        %126 = sbr.rel (%p124) target = $region16
      $region15: #{tpu_custom_call.1} parent=5 // pred_region
        // Predicated region
        $region17: #{tpu_custom_call.1} parent=15 // pred_check
          %p127 = pneg %p48
        $region18: #{tpu_custom_call.1} parent=15 // pred_check_branch
          %129 = sbr.rel (%p127) target = $region20
        $region19: #{tpu_custom_call.1} parent=15 // pred_region
          %s130 = sand.u32 %s38, 1
          %s131 = scalar_lea.sflag [#allocation5], %s130
          %s132 = sand.u32 %s38, 1
          %s133 = smul.addr %s132, 8
          %s134 = scalar_lea.vmem [#allocation4], %s133
          %s135 = smul.u32 2, %s22
          %s137 = ssub.s32 128, 128
          %138 = vsyncadd %s131, %s137
          %s139 = smul.addr %s21, 2
          %s140 = sadd.s32 %s135, %s139
          %s141 = smul.addr %s140, 64
          %s142 = scalar_lea.hbm %s0, %s141
          %s144 = sshll.u32 %s134, 4
          %s145 = int_to_ptr.vmem [resolvable:$true] %s144
          %147 = dma.hbm_to_vmem [thread:$0]  %s142, 128, %s145, %s131
        $region20: #{tpu_custom_call.1} parent=15 // pred_fallthru
          _
        // Predicated region
        $region21: #{tpu_custom_call.1} parent=15 // pred_check
          %p148 = pneg %p76
        $region22: #{tpu_custom_call.1} parent=15 // pred_check_branch
          %150 = sbr.rel (%p148) target = $region24
        $region23: #{tpu_custom_call.1} parent=15 // pred_region
          %s151 = smul.u32 2, %s22
          %p152 = scmp.lt.s32.totalorder %s21, 1
          %s153 = scalar_select %p152, %s21, 1
          %p154 = scmp.lt.s32.totalorder %s151, 1
          %s155 = scalar_select %p154, %s151, 1
          %s156 = smul.addr %s153, 2
          %s157 = sadd.s32 %s155, %s156
          %s158 = scalar_lea.vmem %s1, %s157
          %s159 = smul.u32 2, %s22
        $region24: #{tpu_custom_call.1} parent=15 // pred_fallthru
          _
      $region16: #{tpu_custom_call.1} parent=5 // pred_fallthru
        _
      %p160 = scmp.le.s32.totalorder 1, %s14
      %p161 = scmp.lt.s32.totalorder %s14, 3
      %p162 = pnand %p160, %p161
      %p163 = pneg %p162
      // Predicated region
      $region25: #{tpu_custom_call.1} parent=5 // pred_check
        _
      $region26: #{tpu_custom_call.1} parent=5 // pred_check_branch
        %165 = sbr.rel (%p162) target = $region28
      $region27: #{tpu_custom_call.1} parent=5 // pred_region
        %s166 = ssub.s32 %s14, 1
        %s167 = sand.u32 %s41, 1
        %s168 = scalar_lea.sflag [#allocation5], %s167
        %s169 = sand.u32 %s41, 1
        %s170 = smul.addr %s169, 8
        %s171 = scalar_lea.vmem [#allocation4], %s170
        // Predicated region
        $region29: #{tpu_custom_call.1} parent=27 // pred_check
          %p172 = pneg %p54
        $region30: #{tpu_custom_call.1} parent=27 // pred_check_branch
          %174 = sbr.rel (%p172) target = $region32
        $region31: #{tpu_custom_call.1} parent=27 // pred_region
          %175 = dma.done %s168, 128
        $region32: #{tpu_custom_call.1} parent=27 // pred_fallthru
          _
        %s176 = sand.u32 %s41, 1
        %s177 = scalar_lea.sflag [#allocation5], %s176
        %s178 = sand.u32 %s41, 1
        %s179 = smul.addr %s178, 8
        %s180 = scalar_lea.vmem [#allocation4], %s179
        %p181 = pneg %p54
        %p182 = pneg %p51
        %s183 = smul.u32 2, %s24
        %p184 = scmp.lt.s32.totalorder %s23, 1
        %s185 = scalar_select %p184, %s23, 1
        %p186 = scmp.lt.s32.totalorder %s183, 1
        %s187 = scalar_select %p186, %s183, 1
        %s188 = smul.addr %s185, 2
        %s189 = sadd.s32 %s187, %s188
        %s190 = scalar_lea.vmem %s1, %s189
        %p191 = pneg %p82
        %p192 = pneg %p79
        %p193 = pneg %p108
        %p194 = pneg %p105
        %s195 = sand.u32 %s95, 1
        %s196 = scalar_lea.sflag [#allocation6], %s195
        %s197 = sand.u32 %s95, 1
        %s198 = scalar_lea.vmem [#allocation7], %s197
        %s199 = smul.u32 2, %s24
        %s200 = smul.u32 2, %s24
        %p201 = scmp.lt.s32.totalorder %s23, 1
        %s202 = scalar_select %p201, %s23, 1
        %p203 = scmp.lt.s32.totalorder %s200, 1
        %s204 = scalar_select %p203, %s200, 1
        %s205 = smul.addr %s202, 2
        %s206 = sadd.s32 %s204, %s205
        %s207 = scalar_lea.vmem %s1, %s206
        %s208 = smul.u32 2, %s24
        %p209 = scmp.eq.s32.totalorder %s24, 0
        // Predicated region
        $region33: #{tpu_custom_call.1} parent=27 // pred_check
          %p210 = pneg %p209
        $region34: #{tpu_custom_call.1} parent=27 // pred_check_branch
          %212 = sbr.rel (%p210) target = $region36
        $region35: #{tpu_custom_call.1} parent=27 // pred_region
          %vm213 = vcmask 3072
          %214 = vst.msk [vmem:[#allocation2] sm:$0xf] %vm213, 0.0
          %215 = vst.msk [vmem:[#allocation3] sm:$0xf] %vm213, 0.0
        $region36: #{tpu_custom_call.1} parent=27 // pred_fallthru
          _
        %v216 = vld [vmem:[%s171] sm:$0xff]
        %v217 = vld [vmem:[%s207] sm:$0x3]
        %v218 = vunpack.c.0.s8 %v217
        %v219 = vand.u32 %v218, 255
        %v221 = vcombine.high %v216, %v216
        %vm223 = vcmask 1043456
        %v224 = vsel %vm223, %v216, -inf
        %v225 = vrot.slane %v224, 4
        %v226 = vmax.f32 %v224, %v225
        %v227 = vrot.slane %v226, 2
        %v228 = vmax.f32 %v226, %v227
        %v229 = vrot.slane %v228, 1
        %v230 = vmax.f32 %v228, %v229
        %v231 = vsel %vm223, %v221, -inf
        %v232 = vrot.slane %v231, 4
        %v233 = vmax.f32 %v231, %v232
        %v234 = vrot.slane %v233, 2
        %v235 = vmax.f32 %v233, %v234
        %v236 = vrot.slane %v235, 1
        %v237 = vmax.f32 %v235, %v236
        %v240 = vcombine.low %v230, %v237
        %v242 = vsub.f32 %v216, %v240
        %v243 = vmul.f32 %v242, 1.442695
        %v244 = vpow.pop %v243
        %v246 = vcombine.high %v244, %v244
        %v248 = vsel %vm223, %v244, 0.0
        %v249 = vrot.slane %v248, 4
        %v250 = vadd.f32 %v248, %v249
        %v251 = vrot.slane %v250, 2
        %v252 = vadd.f32 %v250, %v251
        %v253 = vrot.slane %v252, 1
        %v254 = vadd.f32 %v252, %v253
        %v255 = vsel %vm223, %v246, 0.0
        %v256 = vrot.slane %v255, 4
        %v257 = vadd.f32 %v255, %v256
        %v258 = vrot.slane %v257, 2
        %v259 = vadd.f32 %v257, %v258
        %v260 = vrot.slane %v259, 1
        %v261 = vadd.f32 %v259, %v260
        %v262 = vrcp.pop %v254
        %v263 = vmul.f32 1.0, %v262
        %v264 = vrcp.pop %v261
        %v265 = vmul.f32 1.0, %v264
        %v268 = vcombine.low %v263, %v265
        %v270 = vmul.f32 %v244, %v268
        %vm271 = vcmp.ne.s32.totalorder %v219, 255
        %v272 = vsel %vm271, 1, 0
        %v273 = vcvt.s32.f32 %v272
        %vm274 = vcmp.gt.s32.totalorder %v219, 0
        %v275 = vsel %vm274, %v219, 0
        %vm276 = vcmp.lt.s32.totalorder %v275, 3
        %v277 = vsel %vm276, %v275, 3
        %v278 = vlaneseq
        %v279 = vshrl.u32 %v278, 7
        %v280 = vlaneseq
        %v281 = vshrl.u32 %v280, 7
        %v282 = vsub.s32 0, %v281
        %v283 = vrot.slane %v277, %v282
        %v284 = vlaneseq
        %v285 = vshrl.u32 %v284, 7
        %v286 = vsub.s32 4, %v285
        %v287 = vrot.slane %v277, %v286
        %v288 = vlaneseq
        %v289 = vshrl.u32 %v288, 7
        %v290 = vsub.s32 0, %v289
        %v291 = vrot.slane %v283, %v290
        %v292 = vlaneseq
        %v293 = vshrl.u32 %v292, 7
        %v294 = vsub.s32 0, %v293
        %v295 = vrot.slane %v287, %v294
        %vm296 = vcmp.eq.s32.totalorder %v279, %v291
        %vm297 = vcmp.eq.s32.totalorder %v279, %v295
        %v298 = vsel %vm296, 1, 0
        %v299 = vsel %vm297, 1, 0
        %v300 = vcvt.s32.f32 %v298
        %v301 = vcvt.s32.f32 %v299
        %v302 = vld [vmem:[#allocation2] sm:$0xf]
        %v305 = vcombine.low %v300, %v301
        %v307 = vmul.f32 %v270, %v305
        %v309 = vlaneseq
        %v310 = vshrl.u32 %v309, 7
        %v311 = vsub.s32 0, %v310
        %v312 = vrot.slane %v273, %v311
        %v313 = vlaneseq
        %v314 = vshrl.u32 %v313, 7
        %v315 = vsub.s32 4, %v314
        %v316 = vrot.slane %v273, %v315
        %v319 = vlaneseq
        %v320 = vshrl.u32 %v319, 7
        %v321 = vsub.s32 0, %v320
        %v322 = vrot.slane %v312, %v321
        %v323 = vlaneseq
        %v324 = vshrl.u32 %v323, 7
        %v325 = vsub.s32 0, %v324
        %v326 = vrot.slane %v316, %v325
        %v329 = vcombine.low %v322, %v326
        %v331 = vmul.f32 %v307, %v329
        %v333 = vcombine.high %v331, %v331
        %v335 = vsel %vm223, %v331, 0.0
        %v336 = vsel %vm223, %v333, 0.0
        %v337 = vadd.f32 %v335, %v336
        %338 = vadd.xlane.f32.xlu0 %v337
        %v339 = vpop.xlane.xlu0 %338
        %v340 = vadd.f32 %v302, %v339
        %vm341 = vcmask 3072
        %342 = vst.msk [vmem:[#allocation2] sm:$0xf] %vm341, %v340
        %v343 = vmul.f32 %v270, %v270
        %v344 = vld [vmem:[#allocation3] sm:$0xf]
        %v345 = vadd.f32 %v343, %v305
        %v347 = vcombine.high %v345, %v345
        %v349 = vsel %vm223, %v345, 0.0
        %v350 = vsel %vm223, %v347, 0.0
        %v351 = vadd.f32 %v349, %v350
        %352 = vadd.xlane.f32.xlu0 %v351
        %v353 = vpop.xlane.xlu0 %352
        %v354 = vadd.f32 %v344, %v353
        %355 = vst.msk [vmem:[#allocation3] sm:$0xf] %vm341, %v354
        // Predicated region
        $region37: #{tpu_custom_call.1} parent=27 // pred_check
          %p356 = pneg %p209
        $region38: #{tpu_custom_call.1} parent=27 // pred_check_branch
          %358 = sbr.rel (%p356) target = $region40
        $region39: #{tpu_custom_call.1} parent=27 // pred_region
          %v359 = vld [vmem:[#allocation2] sm:$0xf]
          %v360 = vmul.f32 %v359, 2.0
          %v361 = vadd.f32 %v360, 1.0
          %v362 = vld [vmem:[#allocation3] sm:$0xf]
          %v363 = vadd.f32 %v362, 1.0
          %v364 = vrcp.pop %v363
          %v365 = vmul.f32 %v361, %v364
          %v366 = vsub.f32 1.0, %v365
          %v367 = vsel %vm341, %v366, 0.0
          %v368 = vrot.slane %v367, 4
          %v369 = vadd.f32 %v367, %v368
          %v370 = vrot.slane %v369, 2
          %v371 = vadd.f32 %v369, %v370
          %v372 = vrot.slane %v371, 1
          %v373 = vadd.f32 %v371, %v372
          %v374 = vmul.f32 %v373, 0.25
          %376 = vset.pattern.permute.xlu0 0
          %377 = vperm.xlu0 %376, %v374
          %v378 = vpop.permute.xlu0 %377
          %380 = vst [vmem:[%s198] sm:$0x1] %v378
        $region40: #{tpu_custom_call.1} parent=27 // pred_fallthru
          _
        %s381 = sand.u32 %s95, 1
        %s382 = scalar_lea.sflag [#allocation6], %s381
        %s383 = sand.u32 %s95, 1
        %s384 = scalar_lea.vmem [#allocation7], %s383
        // Predicated region
        $region41: #{tpu_custom_call.1} parent=27 // pred_check
          %p385 = pneg %p105
        $region42: #{tpu_custom_call.1} parent=27 // pred_check_branch
          %387 = sbr.rel (%p385) target = $region44
        $region43: #{tpu_custom_call.1} parent=27 // pred_region
          %s389 = ssub.s32 16, 16
          %390 = vsyncadd %s382, %s389
          %s391 = smul.addr %s23, 16
          %s392 = scalar_lea.hbm %s2, %s391
          %s394 = sshll.u32 %s384, 4
          %s395 = int_to_ptr.vmem [resolvable:$true] %s394
          %397 = dma.vmem_to_hbm [thread:$0]  %s395, 16, %s392, %s382
        $region44: #{tpu_custom_call.1} parent=27 // pred_fallthru
          _
      $region28: #{tpu_custom_call.1} parent=5 // pred_fallthru
        _
      %p398 = scmp.le.s32.totalorder 2, %s14
      // Predicated region
      $region45: #{tpu_custom_call.1} parent=5 // pred_check
        %p399 = pneg %p398
      $region46: #{tpu_custom_call.1} parent=5 // pred_check_branch
        %401 = sbr.rel (%p399) target = $region48
      $region47: #{tpu_custom_call.1} parent=5 // pred_region
        %s402 = ssub.s32 %s14, 2
        // Predicated region
        $region49: #{tpu_custom_call.1} parent=47 // pred_check
          %p403 = pneg %p111
        $region50: #{tpu_custom_call.1} parent=47 // pred_check_branch
          %405 = sbr.rel (%p403) target = $region52
        $region51: #{tpu_custom_call.1} parent=47 // pred_region
          %s406 = sand.u32 %s96, 1
          %s407 = scalar_lea.sflag [#allocation6], %s406
          %s408 = sand.u32 %s96, 1
          %s409 = scalar_lea.vmem [#allocation7], %s408
          %410 = dma.done %s407, 16
        $region52: #{tpu_custom_call.1} parent=47 // pred_fallthru
          _
      $region48: #{tpu_custom_call.1} parent=5 // pred_fallthru
        _
    $region6: #{tpu_custom_call.1} parent=1 // loop_footer
      %s18 = sadd.s32 1, %s14
    $region7: #{tpu_custom_call.1} parent=1 // loop_footer_branch
      %13 = sbr.rel target = $region3
    $region8: #{tpu_custom_call.1} parent=1 // loop_exit
      _
    %411 = vsyncpa [#allocation5], 1
    %s412 = scalar_lea.sflag [#allocation5], 1
    %413 = vsyncpa %s412, 1
    %414 = vsyncpa [#allocation6], 1
    %s415 = scalar_lea.sflag [#allocation6], 1
    %416 = vsyncpa %s415, 1

</llo_original>
